<compile_context>
chip_gen: v5e
topology: v5e:2x2
jax: 0.10.0
libtpu: 0.0.40
codegen_flags: <defaults>
</compile_context>

<pallas_src>
import jax
import jax.numpy as jnp
from jax import lax
from jax.experimental import pallas as pl
from jax.experimental.pallas import tpu as pltpu


_VMEM_LIMIT = 48 * 1024 * 1024  # portable across v5e/v6e/v7x; raise on v5e/v6e


# ---------------------------------------------------------------------------
# Kernel A: node-feature MLP  f = W4(relu(W3(relu(W2(relu(W1(x)))))))
# Weights are pre-transposed to [in, out]; biases are [1, out].
# ---------------------------------------------------------------------------
def _node_features_kernel(x_ref, w1_ref, b1_ref, w2_ref, b2_ref,
                          w3_ref, b3_ref, w4_ref, b4_ref, f_ref):
    h = jnp.dot(x_ref[...], w1_ref[...],
                preferred_element_type=jnp.float32) + b1_ref[...]
    h = jnp.maximum(h, 0.0)
    h = jnp.dot(h, w2_ref[...],
                preferred_element_type=jnp.float32) + b2_ref[...]
    h = jnp.maximum(h, 0.0)
    h = jnp.dot(h, w3_ref[...],
                preferred_element_type=jnp.float32) + b3_ref[...]
    h = jnp.maximum(h, 0.0)
    f = jnp.dot(h, w4_ref[...],
                preferred_element_type=jnp.float32) + b4_ref[...]
    f_ref[...] = f.astype(f_ref.dtype)


def _node_features(nodes, w1t, b1, w2t, b2, w3t, b3, w4t, b4, *, block_rows):
    n, f_in = nodes.shape
    f_out = w1t.shape[1]
    full = lambda i: (0, 0)
    return pl.pallas_call(
        _node_features_kernel,
        out_shape=jax.ShapeDtypeStruct((n, f_out), jnp.float32),
        grid_spec=pl.GridSpec(
            grid=(n // block_rows,),
            in_specs=[
                pl.BlockSpec((block_rows, f_in), lambda i: (i, 0)),  # x tile
                pl.BlockSpec((f_in, f_out), full),                   # W1 (resident)
                pl.BlockSpec((1, f_out), full),                      # b1
                pl.BlockSpec((f_out, f_out), full),                  # W2
                pl.BlockSpec((1, f_out), full),                      # b2
                pl.BlockSpec((f_out, f_out), full),                  # W3
                pl.BlockSpec((1, f_out), full),                      # b3
                pl.BlockSpec((f_out, f_out), full),                  # W4
                pl.BlockSpec((1, f_out), full),                      # b4
            ],
            out_specs=pl.BlockSpec((block_rows, f_out), lambda i: (i, 0)),
        ),
        compiler_params=pltpu.CompilerParams(
            dimension_semantics=("parallel",),
            vmem_limit_bytes=_VMEM_LIMIT),
    )(nodes, w1t, b1.reshape(1, f_out), w2t, b2.reshape(1, f_out),
      w3t, b3.reshape(1, f_out), w4t, b4.reshape(1, f_out))


# ---------------------------------------------------------------------------
# Kernel B: attention scores + softmax + aggregation, one row tile per step.
#   inputs : f (resident f32 [N,F]), adj row tile (int8), a1/a2/a_b
#   outputs: y row tile (f32, lane dim F), attn row tile (bf16, lane dim N)
# ---------------------------------------------------------------------------
def _make_attention_kernel(alpha, block_rows):
    def kernel(f_ref, adj_ref, a1_ref, a2_ref, ab_ref, y_ref, attn_ref):
        i = pl.program_id(0)
        row0 = pl.multiple_of(i * block_rows, block_rows)

        f_all = f_ref[...]                               # [N, F] (resident)
        f_i = f_ref[pl.ds(row0, block_rows), :]          # [TM, F] (this row tile)

        # e[i, j] = LeakyReLU( (f_i . a1 + a_b) + (f_j . a2) )
        s = jnp.dot(f_i, a1_ref[...],
                    preferred_element_type=jnp.float32) + ab_ref[...]   # [TM, 1]
        # Rank-1 term: tiny mat-vec over all nodes -> [1, N]; recomputed each
        # grid step (N*F MACs, negligible) to stay megacore-safe.
        t = lax.dot_general(a2_ref[...], f_all, (((1,), (1,)), ((), ())),
                            preferred_element_type=jnp.float32)         # [1, N]
        e = s + t                                                       # [TM, N]
        e = jnp.where(e >= 0.0, e, alpha * e)            # LeakyReLU

        # Mask disconnected pairs (int8 adjacency), then row softmax (lane axis).
        conn = adj_ref[...].astype(jnp.float32)          # 0 / 1
        e = jnp.where(conn < 0.5, -jnp.inf, e)
        m = jnp.max(e, axis=-1, keepdims=True)
        p = jnp.exp(e - m)
        denom = jnp.sum(p, axis=-1, keepdims=True)
        attn = p * pl.reciprocal(denom, approx=True)     # [TM, N]

        # bf16 attention output halves the N^2 HBM write.
        attn_b16 = attn.astype(jnp.bfloat16)
        attn_ref[...] = attn_b16

        # TODO(synk): F.dropout on the attention matrix is omitted (eval-mode
        # identity); training-mode dropout would use pltpu.prng_seed /
        # pltpu.stateful_bernoulli here.

        # Aggregation on the MXU with bf16 inputs, f32 accumulation.
        out = jnp.dot(attn_b16, f_all.astype(jnp.bfloat16),
                      preferred_element_type=jnp.float32)               # [TM, F]
        y_ref[...] = jnp.where(out >= 0.0, out, alpha * out).astype(y_ref.dtype)

    return kernel


def graph_attn_forward(nodes, adj, params, *, alpha,
                       block_rows_attn=128, block_rows_mlp=None):
    """nodes: [N, F_in]; adj: [N, N] (int8/bool mask, or float thresholded at
    0.5); params holds PyTorch-layout weights.  Returns (y, attn)."""
    n, _ = nodes.shape
    f_out = params["w1"].shape[0]
    if block_rows_mlp is None:
        block_rows_mlp = min(512, n)
    assert n % block_rows_attn == 0 and n % block_rows_mlp == 0

    # Adjacency as a compact int8 mask (4x less HBM read than f32).
    if jnp.issubdtype(adj.dtype, jnp.floating):
        adj_i8 = (adj >= 0.5).astype(jnp.int8)
    else:
        adj_i8 = adj.astype(jnp.int8)

    # Kernel A: node features (large streaming tiles, resident weights).
    f = _node_features(
        nodes,
        params["w1"].T, params["b1"],
        params["w2"].T, params["b2"],
        params["w3"].T, params["b3"],
        params["w4"].T, params["b4"],
        block_rows=block_rows_mlp)

    # Split the attention vector `a` (Linear(2*F_out -> 1)).
    a_w = params["a_w"]                       # [1, 2*F_out]
    a1 = a_w[0, :f_out].reshape(f_out, 1)     # multiplies f_i
    a2 = a_w[0, f_out:].reshape(1, f_out)     # multiplies f_j
    ab = params["a_b"].reshape(1, 1)

    full = lambda i: (0, 0)
    y, attn = pl.pallas_call(
        _make_attention_kernel(alpha, block_rows_attn),
        out_shape=(jax.ShapeDtypeStruct((n, f_out), jnp.float32),
                   jax.ShapeDtypeStruct((n, n), jnp.bfloat16)),
        grid_spec=pl.GridSpec(
            grid=(n // block_rows_attn,),
            in_specs=[
                pl.BlockSpec((n, f_out), full),                        # f (resident)
                pl.BlockSpec((block_rows_attn, n), lambda i: (i, 0)),  # adj (int8)
                pl.BlockSpec((f_out, 1), full),                        # a1
                pl.BlockSpec((1, f_out), full),                        # a2
                pl.BlockSpec((1, 1), full),                            # a bias
            ],
            out_specs=(pl.BlockSpec((block_rows_attn, f_out), lambda i: (i, 0)),
                       pl.BlockSpec((block_rows_attn, n), lambda i: (i, 0))),
        ),
        compiler_params=pltpu.CompilerParams(
            dimension_semantics=("parallel",),
            vmem_limit_bytes=_VMEM_LIMIT),
    )(f, adj_i8, a1, a2, ab)
    return y, attn


if __name__ == "__main__":
    # Lane-aligned shapes (N, F_in, F_out multiples of 128); grid lengths >= 2
    # for both kernels so megacore sharding is exercised.
    n_nodes, in_features, out_features = 512, 128, 128
    alpha = 0.2              # LeakyReLU slope
    block_rows_attn = 128    # kernel B: 4 row tiles
    block_rows_mlp = 256     # kernel A: 2 row tiles (decoupled, larger)

    key = jax.random.PRNGKey(0)
    keys = jax.random.split(key, 12)

    def init_linear(kw, kb, fan_out, fan_in):
        bound = 1.0 / (fan_in ** 0.5)
        w = jax.random.uniform(kw, (fan_out, fan_in), minval=-bound,
                               maxval=bound, dtype=jnp.float32)
        b = jax.random.uniform(kb, (fan_out,), minval=-bound,
                               maxval=bound, dtype=jnp.float32)
        return w, b

    w1, b1 = init_linear(keys[0], keys[1], out_features, in_features)
    w2, b2 = init_linear(keys[2], keys[3], out_features, out_features)
    w3, b3 = init_linear(keys[4], keys[5], out_features, out_features)
    w4, b4 = init_linear(keys[6], keys[7], out_features, out_features)
    a_w, a_b = init_linear(keys[8], keys[9], 1, 2 * out_features)

    nodes = jax.random.normal(keys[10], (n_nodes, in_features), dtype=jnp.float32)
    adj_i8 = (jax.random.uniform(keys[11], (n_nodes, n_nodes)) < 0.3).astype(jnp.int8)
    adj_i8 = jnp.maximum(adj_i8, jnp.eye(n_nodes, dtype=jnp.int8))  # self-loops
    adj_f32 = adj_i8.astype(jnp.float32)     # float adjacency, as in the PyTorch spec

    params = dict(w1=w1, b1=b1, w2=w2, b2=b2, w3=w3, b3=b3, w4=w4, b4=b4,
                  a_w=a_w, a_b=a_b)

    y, attn = graph_attn_forward(nodes, adj_i8, params, alpha=alpha,
                                 block_rows_attn=block_rows_attn,
                                 block_rows_mlp=block_rows_mlp)
    jax.block_until_ready((y, attn))

    # Pure-JAX reference (eval-mode forward, high-precision matmuls).
    def ref_forward(x, a):
        hp = jax.lax.Precision.HIGHEST
        f = jax.nn.relu(jnp.dot(x, w1.T, precision=hp) + b1)
        f = jax.nn.relu(jnp.dot(f, w2.T, precision=hp) + b2)
        f = jax.nn.relu(jnp.dot(f, w3.T, precision=hp) + b3)
        f = jnp.dot(f, w4.T, precision=hp) + b4
        s = jnp.dot(f, a_w[0, :out_features], precision=hp)
        t = jnp.dot(f, a_w[0, out_features:], precision=hp)
        e = s[:, None] + t[None, :] + a_b[0]
        e = jnp.where(e >= 0, e, alpha * e)
        e = jnp.where(a < 0.5, -jnp.inf, e)
        att = jax.nn.softmax(e, axis=1)
        out = jnp.dot(att, f, precision=hp)
        return jnp.where(out >= 0, out, alpha * out), att

    y_ref, attn_ref = ref_forward(nodes, adj_f32)

    assert y.shape == (n_nodes, out_features)
    assert attn.shape == (n_nodes, n_nodes)
    # attn is emitted in bf16; y uses bf16 MXU inputs with f32 accumulation.
    assert jnp.allclose(attn.astype(jnp.float32), attn_ref, atol=5e-3, rtol=5e-3)
    assert jnp.allclose(y, y_ref, atol=5e-3, rtol=5e-3)

    print("KERNEL_OK")
</pallas_src>

<mosaic_0001>
module attributes {stable_mosaic.version = 11 : i64} {
  func.func @_node_features_kernel(%arg0: i32, %arg1: memref<256x128xf32, #tpu.memory_space<vmem>>, %arg2: memref<128x128xf32, #tpu.memory_space<vmem>>, %arg3: memref<1x128xf32, #tpu.memory_space<vmem>>, %arg4: memref<128x128xf32, #tpu.memory_space<vmem>>, %arg5: memref<1x128xf32, #tpu.memory_space<vmem>>, %arg6: memref<128x128xf32, #tpu.memory_space<vmem>>, %arg7: memref<1x128xf32, #tpu.memory_space<vmem>>, %arg8: memref<128x128xf32, #tpu.memory_space<vmem>>, %arg9: memref<1x128xf32, #tpu.memory_space<vmem>>, %arg10: memref<256x128xf32, #tpu.memory_space<vmem>>) attributes {dimension_semantics = [#tpu.dimension_semantics<parallel>], iteration_bounds = array<i64: 2>, scalar_prefetch = 0 : i64, scratch_operands = 0 : i64, tpu.core_type = #tpu.core_type<tc>, window_params = [{transform_indices = @transform_0, window_bounds = array<i64: 256, 128>}, {pipeline_mode = #tpu.pipeline_mode<synchronous>, transform_indices = @transform_1, window_bounds = array<i64: 128, 128>}, {pipeline_mode = #tpu.pipeline_mode<synchronous>, transform_indices = @transform_2, window_bounds = array<i64: 1, 128>}, {pipeline_mode = #tpu.pipeline_mode<synchronous>, transform_indices = @transform_3, window_bounds = array<i64: 128, 128>}, {pipeline_mode = #tpu.pipeline_mode<synchronous>, transform_indices = @transform_4, window_bounds = array<i64: 1, 128>}, {pipeline_mode = #tpu.pipeline_mode<synchronous>, transform_indices = @transform_5, window_bounds = array<i64: 128, 128>}, {pipeline_mode = #tpu.pipeline_mode<synchronous>, transform_indices = @transform_6, window_bounds = array<i64: 1, 128>}, {pipeline_mode = #tpu.pipeline_mode<synchronous>, transform_indices = @transform_7, window_bounds = array<i64: 128, 128>}, {pipeline_mode = #tpu.pipeline_mode<synchronous>, transform_indices = @transform_8, window_bounds = array<i64: 1, 128>}, {transform_indices = @transform_9, window_bounds = array<i64: 256, 128>}]} {
    %c0 = arith.constant 0 : index
    %c0_0 = arith.constant 0 : index
    %0 = vector.load %arg1[%c0, %c0_0] : memref<256x128xf32, #tpu.memory_space<vmem>>, vector<256x128xf32>
    %c0_1 = arith.constant 0 : index
    %c0_2 = arith.constant 0 : index
    %1 = vector.load %arg2[%c0_1, %c0_2] : memref<128x128xf32, #tpu.memory_space<vmem>>, vector<128x128xf32>
    %cst = arith.constant dense<0.000000e+00> : vector<256x128xf32>
    %2 = tpu.matmul %0, %1, %cst {dimension_numbers = #tpu.dot_dimension_numbers<[1], [0], [0], [1], [0, 0, 1, 1], [], []>} : vector<256x128xf32>, vector<128x128xf32>, vector<256x128xf32> -> vector<256x128xf32>
    %c0_3 = arith.constant 0 : index
    %c0_4 = arith.constant 0 : index
    %3 = vector.load %arg3[%c0_3, %c0_4] : memref<1x128xf32, #tpu.memory_space<vmem>>, vector<1x128xf32>
    %4 = vector.broadcast %3 : vector<1x128xf32> to vector<256x128xf32>
    %5 = arith.addf %2, %4 : vector<256x128xf32>
    %cst_5 = arith.constant 0.000000e+00 : f32
    %6 = vector.broadcast %cst_5 : f32 to vector<256x128xf32>
    %7 = arith.maximumf %5, %6 : vector<256x128xf32>
    %c0_6 = arith.constant 0 : index
    %c0_7 = arith.constant 0 : index
    %8 = vector.load %arg4[%c0_6, %c0_7] : memref<128x128xf32, #tpu.memory_space<vmem>>, vector<128x128xf32>
    %cst_8 = arith.constant dense<0.000000e+00> : vector<256x128xf32>
    %9 = tpu.matmul %7, %8, %cst_8 {dimension_numbers = #tpu.dot_dimension_numbers<[1], [0], [0], [1], [0, 0, 1, 1], [], []>} : vector<256x128xf32>, vector<128x128xf32>, vector<256x128xf32> -> vector<256x128xf32>
    %c0_9 = arith.constant 0 : index
    %c0_10 = arith.constant 0 : index
    %10 = vector.load %arg5[%c0_9, %c0_10] : memref<1x128xf32, #tpu.memory_space<vmem>>, vector<1x128xf32>
    %11 = vector.broadcast %10 : vector<1x128xf32> to vector<256x128xf32>
    %12 = arith.addf %9, %11 : vector<256x128xf32>
    %cst_11 = arith.constant 0.000000e+00 : f32
    %13 = vector.broadcast %cst_11 : f32 to vector<256x128xf32>
    %14 = arith.maximumf %12, %13 : vector<256x128xf32>
    %c0_12 = arith.constant 0 : index
    %c0_13 = arith.constant 0 : index
    %15 = vector.load %arg6[%c0_12, %c0_13] : memref<128x128xf32, #tpu.memory_space<vmem>>, vector<128x128xf32>
    %cst_14 = arith.constant dense<0.000000e+00> : vector<256x128xf32>
    %16 = tpu.matmul %14, %15, %cst_14 {dimension_numbers = #tpu.dot_dimension_numbers<[1], [0], [0], [1], [0, 0, 1, 1], [], []>} : vector<256x128xf32>, vector<128x128xf32>, vector<256x128xf32> -> vector<256x128xf32>
    %c0_15 = arith.constant 0 : index
    %c0_16 = arith.constant 0 : index
    %17 = vector.load %arg7[%c0_15, %c0_16] : memref<1x128xf32, #tpu.memory_space<vmem>>, vector<1x128xf32>
    %18 = vector.broadcast %17 : vector<1x128xf32> to vector<256x128xf32>
    %19 = arith.addf %16, %18 : vector<256x128xf32>
    %cst_17 = arith.constant 0.000000e+00 : f32
    %20 = vector.broadcast %cst_17 : f32 to vector<256x128xf32>
    %21 = arith.maximumf %19, %20 : vector<256x128xf32>
    %c0_18 = arith.constant 0 : index
    %c0_19 = arith.constant 0 : index
    %22 = vector.load %arg8[%c0_18, %c0_19] : memref<128x128xf32, #tpu.memory_space<vmem>>, vector<128x128xf32>
    %cst_20 = arith.constant dense<0.000000e+00> : vector<256x128xf32>
    %23 = tpu.matmul %21, %22, %cst_20 {dimension_numbers = #tpu.dot_dimension_numbers<[1], [0], [0], [1], [0, 0, 1, 1], [], []>} : vector<256x128xf32>, vector<128x128xf32>, vector<256x128xf32> -> vector<256x128xf32>
    %c0_21 = arith.constant 0 : index
    %c0_22 = arith.constant 0 : index
    %24 = vector.load %arg9[%c0_21, %c0_22] : memref<1x128xf32, #tpu.memory_space<vmem>>, vector<1x128xf32>
    %25 = vector.broadcast %24 : vector<1x128xf32> to vector<256x128xf32>
    %26 = arith.addf %23, %25 : vector<256x128xf32>
    %c0_23 = arith.constant 0 : index
    %c0_24 = arith.constant 0 : index
    %27 = vector.load %arg10[%c0_23, %c0_24] : memref<256x128xf32, #tpu.memory_space<vmem>>, vector<256x128xf32>
    tpu.vector_store %arg10[%c0_23, %c0_24], %26 {strides = array<i32>} : memref<256x128xf32, #tpu.memory_space<vmem>>, vector<256x128xf32>,
    return
  }
  func.func @transform_0(%arg0: i32) -> (i32, i32) {
    %c0_i32 = arith.constant 0 : i32
    %c0_i32_0 = arith.constant 0 : i32
    return %arg0, %c0_i32 : i32, i32
  }
  func.func @transform_1(%arg0: i32) -> (i32, i32) {
    %c0_i32 = arith.constant 0 : i32
    %c0_i32_0 = arith.constant 0 : i32
    %c0_i32_1 = arith.constant 0 : i32
    return %c0_i32, %c0_i32_0 : i32, i32
  }
  func.func @transform_2(%arg0: i32) -> (i32, i32) {
    %c0_i32 = arith.constant 0 : i32
    %c0_i32_0 = arith.constant 0 : i32
    %c0_i32_1 = arith.constant 0 : i32
    return %c0_i32, %c0_i32_0 : i32, i32
  }
  func.func @transform_3(%arg0: i32) -> (i32, i32) {
    %c0_i32 = arith.constant 0 : i32
    %c0_i32_0 = arith.constant 0 : i32
    %c0_i32_1 = arith.constant 0 : i32
    return %c0_i32, %c0_i32_0 : i32, i32
  }
  func.func @transform_4(%arg0: i32) -> (i32, i32) {
    %c0_i32 = arith.constant 0 : i32
    %c0_i32_0 = arith.constant 0 : i32
    %c0_i32_1 = arith.constant 0 : i32
    return %c0_i32, %c0_i32_0 : i32, i32
  }
  func.func @transform_5(%arg0: i32) -> (i32, i32) {
    %c0_i32 = arith.constant 0 : i32
    %c0_i32_0 = arith.constant 0 : i32
    %c0_i32_1 = arith.constant 0 : i32
    return %c0_i32, %c0_i32_0 : i32, i32
  }
  func.func @transform_6(%arg0: i32) -> (i32, i32) {
    %c0_i32 = arith.constant 0 : i32
    %c0_i32_0 = arith.constant 0 : i32
    %c0_i32_1 = arith.constant 0 : i32
    return %c0_i32, %c0_i32_0 : i32, i32
  }
  func.func @transform_7(%arg0: i32) -> (i32, i32) {
    %c0_i32 = arith.constant 0 : i32
    %c0_i32_0 = arith.constant 0 : i32
    %c0_i32_1 = arith.constant 0 : i32
    return %c0_i32, %c0_i32_0 : i32, i32
  }
  func.func @transform_8(%arg0: i32) -> (i32, i32) {
    %c0_i32 = arith.constant 0 : i32
    %c0_i32_0 = arith.constant 0 : i32
    %c0_i32_1 = arith.constant 0 : i32
    return %c0_i32, %c0_i32_0 : i32, i32
  }
  func.func @transform_9(%arg0: i32) -> (i32, i32) {
    %c0_i32 = arith.constant 0 : i32
    %c0_i32_0 = arith.constant 0 : i32
    return %arg0, %c0_i32 : i32, i32
  }
}

</mosaic_0001>

<llo_original>
// kernel: tpu_custom_call.1
$region0: #{tpu_custom_call.1}
  #allocation0 [shape = 'u32[]', space=smem, size = 0x4, offset = 0x4, fixed_abs, tag = 'smem constant byte address 0x4 - core index']
  #allocation1 [shape = 'u32[72,128]{1,0:T(1,128)}', space=vmem, size = 0x9000, scoped, tag = 'internal scratch']
  %s0 = inlined_call_operand.hbm [shape: f32[512,128], index: 0, kind: input, shape index: {}]
  %s1 = inlined_call_operand.hbm [shape: f32[128,128], index: 1, kind: input, shape index: {}]
  %s2 = inlined_call_operand.vmem [shape: f32[1,128], index: 2, kind: input, shape index: {}]
  %s3 = inlined_call_operand.hbm [shape: f32[128,128], index: 3, kind: input, shape index: {}]
  %s4 = inlined_call_operand.vmem [shape: f32[1,128], index: 4, kind: input, shape index: {}]
  %s5 = inlined_call_operand.hbm [shape: f32[128,128], index: 5, kind: input, shape index: {}]
  %s6 = inlined_call_operand.vmem [shape: f32[1,128], index: 6, kind: input, shape index: {}]
  %s7 = inlined_call_operand.hbm [shape: f32[128,128], index: 7, kind: input, shape index: {}]
  %s8 = inlined_call_operand.vmem [shape: f32[1,128], index: 8, kind: input, shape index: {}]
  %s9 = inlined_call_operand.hbm [shape: f32[512,128], index: 9, kind: output, shape index: {}]
  %s10 = sld [smem:[#allocation0]]
  $region89: #{tpu_custom_call.1} parent=0
    _
  %s12 = ssub.s32 1, %s10
  %s13 = scalar_select 0, %s12, %s10
  $region1: #{tpu_custom_call.1} parent=0
    #allocation2 [shape = 'u8[262144]{0}', space=vmem, size = 0x40000, scoped, tag = 'input window, operand 0']
    #allocation3 [shape = 's32[2]{0}', space=sflag, size = 0x8, scoped, tag = 'scoped memory for tpu_custom_call.1']
    #allocation4 [shape = 's32[2]{0}', space=sflag, size = 0x8, scoped, tag = 'scoped memory for tpu_custom_call.1']
    #allocation5 [shape = 'u8[65536]{0}', space=vmem, size = 0x10000, scoped, tag = 'input window, operand 1, single buffered']
    #allocation6 [shape = 's32[1]{0}', space=sflag, size = 0x4, scoped, tag = 'scoped memory for tpu_custom_call.1']
    #allocation7 [shape = 'u8[65536]{0}', space=vmem, size = 0x10000, scoped, tag = 'input window, operand 3, single buffered']
    #allocation8 [shape = 'u8[65536]{0}', space=vmem, size = 0x10000, scoped, tag = 'input window, operand 5, single buffered']
    #allocation9 [shape = 's32[1]{0}', space=sflag, size = 0x4, scoped, tag = 'scoped memory for tpu_custom_call.1']
    #allocation10 [shape = 'u8[65536]{0}', space=vmem, size = 0x10000, scoped, tag = 'input window, operand 7, single buffered']
    #allocation11 [shape = 'u8[262144]{0}', space=vmem, size = 0x40000, scoped, tag = 'output window, operand 0']
    %14 = vsyncpa [#allocation3], 0
    %s15 = scalar_lea.sflag [#allocation3], 1
    %16 = vsyncpa %s15, 0
    %17 = vsyncpa [#allocation6], 0
    %18 = vsyncpa [#allocation9], 0
    %19 = vsyncpa [#allocation4], 0
    %s20 = scalar_lea.sflag [#allocation4], 1
    %21 = vsyncpa %s20, 0
    loop: start=0, step=1, limit=4
    $region2: #{tpu_custom_call.1} parent=1 // loop_pre_header
      _
    $region3: #{tpu_custom_call.1} parent=1 // loop_header
      %s23 = sphi 0, %s27
      %p24 = scmp.ge.s32.totalorder %s23, 4
      %s33 = sphi 0, %s35
      %s36 = sphi 0, %s33
      %s37 = sphi 0, %s36
      %s53 = sphi 0, %s37
      %s57 = sphi 0, %s57
      %s59 = sphi 0, %s57
      %s60 = sphi 0, %s59
      %s74 = sphi 0, %s60
      %s78 = sphi 0, %s78
      %s80 = sphi 0, %s78
      %s81 = sphi 0, %s80
      %s95 = sphi 0, %s81
      %s99 = sphi 0, %s99
      %s101 = sphi 0, %s99
      %s102 = sphi 0, %s101
      %s116 = sphi 0, %s102
      %s120 = sphi 0, %s120
      %s122 = sphi 0, %s120
      %s123 = sphi 0, %s122
      %s137 = sphi 0, %s123
      %s141 = sphi 0, %s141
      %s143 = sphi 0, %s141
      %s144 = sphi 0, %s143
      %s158 = sphi 0, %s144
      %s162 = sphi 0, %s162
      %s164 = sphi 0, %s162
      %s165 = sphi 0, %s164
      %s179 = sphi 0, %s165
      %s183 = sphi 0, %s183
      %s185 = sphi 0, %s183
      %s186 = sphi 0, %s185
      %s200 = sphi 0, %s186
      %s204 = sphi 0, %s204
      %s206 = sphi 0, %s204
      %s207 = sphi 0, %s206
      %s221 = sphi 0, %s207
      %s227 = sphi 0, %s229
      %s230 = sphi 0, %s227
      %s231 = sphi 0, %s230
      %s247 = sphi 0, %s231
    $region4: #{tpu_custom_call.1} parent=1 // loop_header_branch
      %26 = sbr.rel (%p24) target = $region8
    $region5: #{tpu_custom_call.1} parent=1 // loop_body
      %s28 = ssub.s32 %s23, 1
      %s29 = ssub.s32 %s23, 2
      %s30 = sadd.s32 %s23, 1
      %s31 = ssub.s32 %s23, %s30
      %p32 = scmp.eq.s32.totalorder %s31, 0
      %s34 = sadd.s32 %s33, 1
      %s35 = scalar_select %p32, %s33, %s34
      %p38 = pneg %p32
      %p39 = scmp.eq.s32.totalorder %s23, 1
      %p40 = por %p38, %p39
      %p41 = scmp.ne.s32.totalorder %s33, %s36
      %p42 = scmp.eq.s32.totalorder %s23, 0
      %p43 = por %p41, %p42
      %p44 = scmp.ne.s32.totalorder %s33, %s36
      %p45 = scmp.eq.s32.totalorder %s28, 1
      %p46 = por %p44, %p45
      %p47 = scmp.ne.s32.totalorder %s36, %s37
      %p48 = scmp.eq.s32.totalorder %s28, 0
      %p49 = por %p47, %p48
      %p50 = scmp.ne.s32.totalorder %s36, %s37
      %p51 = scmp.eq.s32.totalorder %s29, 1
      %p52 = por %p50, %p51
      %p54 = scmp.ne.s32.totalorder %s37, %s53
      %p55 = scmp.eq.s32.totalorder %s29, 0
      %p56 = por %p54, %p55
      %s58 = sadd.s32 %s57, 1
      %p61 = scmp.eq.s32.totalorder %s23, 1
      %p62 = scmp.ne.s32.totalorder %s57, %s59
      %p63 = scmp.eq.s32.totalorder %s23, 0
      %p64 = por %p62, %p63
      %p65 = scmp.ne.s32.totalorder %s57, %s59
      %p66 = scmp.eq.s32.totalorder %s28, 1
      %p67 = por %p65, %p66
      %p68 = scmp.ne.s32.totalorder %s59, %s60
      %p69 = scmp.eq.s32.totalorder %s28, 0
      %p70 = por %p68, %p69
      %p71 = scmp.ne.s32.totalorder %s59, %s60
      %p72 = scmp.eq.s32.totalorder %s29, 1
      %p73 = por %p71, %p72
      %p75 = scmp.ne.s32.totalorder %s60, %s74
      %p76 = scmp.eq.s32.totalorder %s29, 0
      %p77 = por %p75, %p76
      %s79 = sadd.s32 %s78, 1
      %p82 = scmp.eq.s32.totalorder %s23, 1
      %p83 = scmp.ne.s32.totalorder %s78, %s80
      %p84 = scmp.eq.s32.totalorder %s23, 0
      %p85 = por %p83, %p84
      %p86 = scmp.ne.s32.totalorder %s78, %s80
      %p87 = scmp.eq.s32.totalorder %s28, 1
      %p88 = por %p86, %p87
      %p89 = scmp.ne.s32.totalorder %s80, %s81
      %p90 = scmp.eq.s32.totalorder %s28, 0
      %p91 = por %p89, %p90
      %p92 = scmp.ne.s32.totalorder %s80, %s81
      %p93 = scmp.eq.s32.totalorder %s29, 1
      %p94 = por %p92, %p93
      %p96 = scmp.ne.s32.totalorder %s81, %s95
      %p97 = scmp.eq.s32.totalorder %s29, 0
      %p98 = por %p96, %p97
      %s100 = sadd.s32 %s99, 1
      %p103 = scmp.eq.s32.totalorder %s23, 1
      %p104 = scmp.ne.s32.totalorder %s99, %s101
      %p105 = scmp.eq.s32.totalorder %s23, 0
      %p106 = por %p104, %p105
      %p107 = scmp.ne.s32.totalorder %s99, %s101
      %p108 = scmp.eq.s32.totalorder %s28, 1
      %p109 = por %p107, %p108
      %p110 = scmp.ne.s32.totalorder %s101, %s102
      %p111 = scmp.eq.s32.totalorder %s28, 0
      %p112 = por %p110, %p111
      %p113 = scmp.ne.s32.totalorder %s101, %s102
      %p114 = scmp.eq.s32.totalorder %s29, 1
      %p115 = por %p113, %p114
      %p117 = scmp.ne.s32.totalorder %s102, %s116
      %p118 = scmp.eq.s32.totalorder %s29, 0
      %p119 = por %p117, %p118
      %s121 = sadd.s32 %s120, 1
      %p124 = scmp.eq.s32.totalorder %s23, 1
      %p125 = scmp.ne.s32.totalorder %s120, %s122
      %p126 = scmp.eq.s32.totalorder %s23, 0
      %p127 = por %p125, %p126
      %p128 = scmp.ne.s32.totalorder %s120, %s122
      %p129 = scmp.eq.s32.totalorder %s28, 1
      %p130 = por %p128, %p129
      %p131 = scmp.ne.s32.totalorder %s122, %s123
      %p132 = scmp.eq.s32.totalorder %s28, 0
      %p133 = por %p131, %p132
      %p134 = scmp.ne.s32.totalorder %s122, %s123
      %p135 = scmp.eq.s32.totalorder %s29, 1
      %p136 = por %p134, %p135
      %p138 = scmp.ne.s32.totalorder %s123, %s137
      %p139 = scmp.eq.s32.totalorder %s29, 0
      %p140 = por %p138, %p139
      %s142 = sadd.s32 %s141, 1
      %p145 = scmp.eq.s32.totalorder %s23, 1
      %p146 = scmp.ne.s32.totalorder %s141, %s143
      %p147 = scmp.eq.s32.totalorder %s23, 0
      %p148 = por %p146, %p147
      %p149 = scmp.ne.s32.totalorder %s141, %s143
      %p150 = scmp.eq.s32.totalorder %s28, 1
      %p151 = por %p149, %p150
      %p152 = scmp.ne.s32.totalorder %s143, %s144
      %p153 = scmp.eq.s32.totalorder %s28, 0
      %p154 = por %p152, %p153
      %p155 = scmp.ne.s32.totalorder %s143, %s144
      %p156 = scmp.eq.s32.totalorder %s29, 1
      %p157 = por %p155, %p156
      %p159 = scmp.ne.s32.totalorder %s144, %s158
      %p160 = scmp.eq.s32.totalorder %s29, 0
      %p161 = por %p159, %p160
      %s163 = sadd.s32 %s162, 1
      %p166 = scmp.eq.s32.totalorder %s23, 1
      %p167 = scmp.ne.s32.totalorder %s162, %s164
      %p168 = scmp.eq.s32.totalorder %s23, 0
      %p169 = por %p167, %p168
      %p170 = scmp.ne.s32.totalorder %s162, %s164
      %p171 = scmp.eq.s32.totalorder %s28, 1
      %p172 = por %p170, %p171
      %p173 = scmp.ne.s32.totalorder %s164, %s165
      %p174 = scmp.eq.s32.totalorder %s28, 0
      %p175 = por %p173, %p174
      %p176 = scmp.ne.s32.totalorder %s164, %s165
      %p177 = scmp.eq.s32.totalorder %s29, 1
      %p178 = por %p176, %p177
      %p180 = scmp.ne.s32.totalorder %s165, %s179
      %p181 = scmp.eq.s32.totalorder %s29, 0
      %p182 = por %p180, %p181
      %s184 = sadd.s32 %s183, 1
      %p187 = scmp.eq.s32.totalorder %s23, 1
      %p188 = scmp.ne.s32.totalorder %s183, %s185
      %p189 = scmp.eq.s32.totalorder %s23, 0
      %p190 = por %p188, %p189
      %p191 = scmp.ne.s32.totalorder %s183, %s185
      %p192 = scmp.eq.s32.totalorder %s28, 1
      %p193 = por %p191, %p192
      %p194 = scmp.ne.s32.totalorder %s185, %s186
      %p195 = scmp.eq.s32.totalorder %s28, 0
      %p196 = por %p194, %p195
      %p197 = scmp.ne.s32.totalorder %s185, %s186
      %p198 = scmp.eq.s32.totalorder %s29, 1
      %p199 = por %p197, %p198
      %p201 = scmp.ne.s32.totalorder %s186, %s200
      %p202 = scmp.eq.s32.totalorder %s29, 0
      %p203 = por %p201, %p202
      %s205 = sadd.s32 %s204, 1
      %p208 = scmp.eq.s32.totalorder %s23, 1
      %p209 = scmp.ne.s32.totalorder %s204, %s206
      %p210 = scmp.eq.s32.totalorder %s23, 0
      %p211 = por %p209, %p210
      %p212 = scmp.ne.s32.totalorder %s204, %s206
      %p213 = scmp.eq.s32.totalorder %s28, 1
      %p214 = por %p212, %p213
      %p215 = scmp.ne.s32.totalorder %s206, %s207
      %p216 = scmp.eq.s32.totalorder %s28, 0
      %p217 = por %p215, %p216
      %p218 = scmp.ne.s32.totalorder %s206, %s207
      %p219 = scmp.eq.s32.totalorder %s29, 1
      %p220 = por %p218, %p219
      %p222 = scmp.ne.s32.totalorder %s207, %s221
      %p223 = scmp.eq.s32.totalorder %s29, 0
      %p224 = por %p222, %p223
      %s225 = ssub.s32 %s23, %s30
      %p226 = scmp.eq.s32.totalorder %s225, 0
      %s228 = sadd.s32 %s227, 1
      %s229 = scalar_select %p226, %s227, %s228
      %p232 = pneg %p226
      %p233 = scmp.eq.s32.totalorder %s23, 1
      %p234 = por %p232, %p233
      %p235 = scmp.ne.s32.totalorder %s227, %s230
      %p236 = scmp.eq.s32.totalorder %s23, 0
      %p237 = por %p235, %p236
      %p238 = scmp.ne.s32.totalorder %s227, %s230
      %p239 = scmp.eq.s32.totalorder %s28, 1
      %p240 = por %p238, %p239
      %p241 = scmp.ne.s32.totalorder %s230, %s231
      %p242 = scmp.eq.s32.totalorder %s28, 0
      %p243 = por %p241, %p242
      %p244 = scmp.ne.s32.totalorder %s230, %s231
      %p245 = scmp.eq.s32.totalorder %s29, 1
      %p246 = por %p244, %p245
      %p248 = scmp.ne.s32.totalorder %s231, %s247
      %p249 = scmp.eq.s32.totalorder %s29, 0
      %p250 = por %p248, %p249
      %p251 = scmp.le.s32.totalorder 1, %s23
      %p252 = scmp.lt.s32.totalorder %s23, 3
      %p253 = pnand %p251, %p252
      %p254 = pneg %p253
      // Predicated region
      $region9: #{tpu_custom_call.1} parent=5 // pred_check
        _
      $region10: #{tpu_custom_call.1} parent=5 // pred_check_branch
        %256 = sbr.rel (%p253) target = $region12
      $region11: #{tpu_custom_call.1} parent=5 // pred_region
        %s257 = ssub.s32 %s23, 1
        // Predicated region
        $region13: #{tpu_custom_call.1} parent=11 // pred_check
          %p258 = pneg %p70
        $region14: #{tpu_custom_call.1} parent=11 // pred_check_branch
          %260 = sbr.rel (%p258) target = $region16
        $region15: #{tpu_custom_call.1} parent=11 // pred_region
          %262 = vsyncadd [#allocation6], 0
          %s263 = sshll.u32 %s1, 4
          %s264 = int_to_ptr.hbm [resolvable:$true] %s263
          %s265 = sshll.u32 [#allocation5], 4
          %s266 = int_to_ptr.vmem [resolvable:$true] %s265
          %271 = dma.hbm_to_vmem [thread:$0]  %s264, 2048, %s266, [#allocation6], 128, 128, 8
        $region16: #{tpu_custom_call.1} parent=11 // pred_fallthru
          _
        // Predicated region
        $region17: #{tpu_custom_call.1} parent=11 // pred_check
          %p272 = pneg %p91
        $region18: #{tpu_custom_call.1} parent=11 // pred_check_branch
          %274 = sbr.rel (%p272) target = $region20
        $region19: #{tpu_custom_call.1} parent=11 // pred_region
          _
        $region20: #{tpu_custom_call.1} parent=11 // pred_fallthru
          _
        // Predicated region
        $region21: #{tpu_custom_call.1} parent=11 // pred_check
          %p275 = pneg %p112
        $region22: #{tpu_custom_call.1} parent=11 // pred_check_branch
          %277 = sbr.rel (%p275) target = $region24
        $region23: #{tpu_custom_call.1} parent=11 // pred_region
          %279 = vsyncadd [#allocation6], 0
          %s280 = sshll.u32 %s3, 4
          %s281 = int_to_ptr.hbm [resolvable:$true] %s280
          %s282 = sshll.u32 [#allocation7], 4
          %s283 = int_to_ptr.vmem [resolvable:$true] %s282
          %288 = dma.hbm_to_vmem [thread:$0]  %s281, 2048, %s283, [#allocation6], 128, 128, 8
        $region24: #{tpu_custom_call.1} parent=11 // pred_fallthru
          _
        // Predicated region
        $region25: #{tpu_custom_call.1} parent=11 // pred_check
          %p289 = pneg %p133
        $region26: #{tpu_custom_call.1} parent=11 // pred_check_branch
          %291 = sbr.rel (%p289) target = $region28
        $region27: #{tpu_custom_call.1} parent=11 // pred_region
          _
        $region28: #{tpu_custom_call.1} parent=11 // pred_fallthru
          _
        // Predicated region
        $region29: #{tpu_custom_call.1} parent=11 // pred_check
          %p292 = pneg %p154
        $region30: #{tpu_custom_call.1} parent=11 // pred_check_branch
          %294 = sbr.rel (%p292) target = $region32
        $region31: #{tpu_custom_call.1} parent=11 // pred_region
          %296 = vsyncadd [#allocation9], 0
          %s297 = sshll.u32 %s5, 4
          %s298 = int_to_ptr.hbm [resolvable:$true] %s297
          %s299 = sshll.u32 [#allocation8], 4
          %s300 = int_to_ptr.vmem [resolvable:$true] %s299
          %305 = dma.hbm_to_vmem [thread:$0]  %s298, 2048, %s300, [#allocation9], 128, 128, 8
        $region32: #{tpu_custom_call.1} parent=11 // pred_fallthru
          _
        // Predicated region
        $region33: #{tpu_custom_call.1} parent=11 // pred_check
          %p306 = pneg %p175
        $region34: #{tpu_custom_call.1} parent=11 // pred_check_branch
          %308 = sbr.rel (%p306) target = $region36
        $region35: #{tpu_custom_call.1} parent=11 // pred_region
          _
        $region36: #{tpu_custom_call.1} parent=11 // pred_fallthru
          _
        // Predicated region
        $region37: #{tpu_custom_call.1} parent=11 // pred_check
          %p309 = pneg %p196
        $region38: #{tpu_custom_call.1} parent=11 // pred_check_branch
          %311 = sbr.rel (%p309) target = $region40
        $region39: #{tpu_custom_call.1} parent=11 // pred_region
          %313 = vsyncadd [#allocation9], 0
          %s314 = sshll.u32 %s7, 4
          %s315 = int_to_ptr.hbm [resolvable:$true] %s314
          %s316 = sshll.u32 [#allocation10], 4
          %s317 = int_to_ptr.vmem [resolvable:$true] %s316
          %322 = dma.hbm_to_vmem [thread:$0]  %s315, 2048, %s317, [#allocation9], 128, 128, 8
        $region40: #{tpu_custom_call.1} parent=11 // pred_fallthru
          _
        // Predicated region
        $region41: #{tpu_custom_call.1} parent=11 // pred_check
          %p323 = pneg %p217
        $region42: #{tpu_custom_call.1} parent=11 // pred_check_branch
          %325 = sbr.rel (%p323) target = $region44
        $region43: #{tpu_custom_call.1} parent=11 // pred_region
          _
        $region44: #{tpu_custom_call.1} parent=11 // pred_fallthru
          _
      $region12: #{tpu_custom_call.1} parent=5 // pred_fallthru
        _
      %p326 = scmp.lt.s32.totalorder %s23, 2
      // Predicated region
      $region45: #{tpu_custom_call.1} parent=5 // pred_check
        %p327 = pneg %p326
      $region46: #{tpu_custom_call.1} parent=5 // pred_check_branch
        %329 = sbr.rel (%p327) target = $region48
      $region47: #{tpu_custom_call.1} parent=5 // pred_region
        // Predicated region
        $region49: #{tpu_custom_call.1} parent=47 // pred_check
          %p330 = pneg %p43
        $region50: #{tpu_custom_call.1} parent=47 // pred_check_branch
          %332 = sbr.rel (%p330) target = $region52
        $region51: #{tpu_custom_call.1} parent=47 // pred_region
          %s333 = sand.u32 %s33, 1
          %s334 = scalar_lea.sflag [#allocation3], %s333
          %s335 = sand.u32 %s33, 1
          %s336 = smul.addr %s335, 256
          %s337 = scalar_lea.vmem [#allocation2], %s336
          %s338 = smul.u32 32, %s23
          %340 = vsyncadd %s334, 0
          %s341 = smul.addr %s338, 8
          %s342 = scalar_lea.hbm %s0, %s341
          %s343 = sshll.u32 %s342, 4
          %s344 = int_to_ptr.hbm [resolvable:$true] %s343
          %s345 = sshll.u32 %s337, 4
          %s346 = int_to_ptr.vmem [resolvable:$true] %s345
          %351 = dma.hbm_to_vmem [thread:$0]  %s344, 4096, %s346, %s334, 128, 128, 8
        $region52: #{tpu_custom_call.1} parent=47 // pred_fallthru
          _
      $region48: #{tpu_custom_call.1} parent=5 // pred_fallthru
        _
      %p352 = scmp.le.s32.totalorder 1, %s23
      %p353 = scmp.lt.s32.totalorder %s23, 3
      %p354 = pnand %p352, %p353
      %p355 = pneg %p354
      // Predicated region
      $region53: #{tpu_custom_call.1} parent=5 // pred_check
        _
      $region54: #{tpu_custom_call.1} parent=5 // pred_check_branch
        %357 = sbr.rel (%p354) target = $region56
      $region55: #{tpu_custom_call.1} parent=5 // pred_region
        %s358 = ssub.s32 %s23, 1
        %s359 = sand.u32 %s36, 1
        %s360 = scalar_lea.sflag [#allocation3], %s359
        %s361 = sand.u32 %s36, 1
        %s362 = smul.addr %s361, 256
        %s363 = scalar_lea.vmem [#allocation2], %s362
        // Predicated region
        $region57: #{tpu_custom_call.1} parent=55 // pred_check
          %p364 = pneg %p49
        $region58: #{tpu_custom_call.1} parent=55 // pred_check_branch
          %366 = sbr.rel (%p364) target = $region60
        $region59: #{tpu_custom_call.1} parent=55 // pred_region
          %368 = dma.done %s360, 4096
        $region60: #{tpu_custom_call.1} parent=55 // pred_fallthru
          _
        // Predicated region
        $region61: #{tpu_custom_call.1} parent=55 // pred_check
          %p369 = pneg %p70
        $region62: #{tpu_custom_call.1} parent=55 // pred_check_branch
          %371 = sbr.rel (%p369) target = $region64
        $region63: #{tpu_custom_call.1} parent=55 // pred_region
          %373 = dma.done [#allocation6], 2048
        $region64: #{tpu_custom_call.1} parent=55 // pred_fallthru
          _
        // Predicated region
        $region65: #{tpu_custom_call.1} parent=55 // pred_check
          %p374 = pneg %p112
        $region66: #{tpu_custom_call.1} parent=55 // pred_check_branch
          %376 = sbr.rel (%p374) target = $region68
        $region67: #{tpu_custom_call.1} parent=55 // pred_region
          %378 = dma.done [#allocation6], 2048
        $region68: #{tpu_custom_call.1} parent=55 // pred_fallthru
          _
        // Predicated region
        $region69: #{tpu_custom_call.1} parent=55 // pred_check
          %p379 = pneg %p154
        $region70: #{tpu_custom_call.1} parent=55 // pred_check_branch
          %381 = sbr.rel (%p379) target = $region72
        $region71: #{tpu_custom_call.1} parent=55 // pred_region
          %383 = dma.done [#allocation9], 2048
        $region72: #{tpu_custom_call.1} parent=55 // pred_fallthru
          _
        // Predicated region
        $region73: #{tpu_custom_call.1} parent=55 // pred_check
          %p384 = pneg %p196
        $region74: #{tpu_custom_call.1} parent=55 // pred_check_branch
          %386 = sbr.rel (%p384) target = $region76
        $region75: #{tpu_custom_call.1} parent=55 // pred_region
          %388 = dma.done [#allocation9], 2048
        $region76: #{tpu_custom_call.1} parent=55 // pred_fallthru
          _
        %s389 = sand.u32 %s36, 1
        %s390 = scalar_lea.sflag [#allocation3], %s389
        %s391 = sand.u32 %s36, 1
        %s392 = smul.addr %s391, 256
        %s393 = scalar_lea.vmem [#allocation2], %s392
        %p394 = pneg %p49
        %p395 = pneg %p46
        %p396 = pneg %p70
        %p397 = pneg %p67
        %p398 = pneg %p91
        %p399 = pneg %p88
        %p400 = pneg %p112
        %p401 = pneg %p109
        %p402 = pneg %p133
        %p403 = pneg %p130
        %p404 = pneg %p154
        %p405 = pneg %p151
        %p406 = pneg %p175
        %p407 = pneg %p172
        %p408 = pneg %p196
        %p409 = pneg %p193
        %p410 = pneg %p217
        %p411 = pneg %p214
        %p412 = pneg %p243
        %p413 = pneg %p240
        %s414 = sand.u32 %s230, 1
        %s415 = scalar_lea.sflag [#allocation4], %s414
        %s416 = sand.u32 %s230, 1
        %s417 = smul.addr %s416, 256
        %s418 = scalar_lea.vmem [#allocation11], %s417
        %s419 = smul.u32 32, %s28
        %s420 = smul.u32 32, %s28
        %v421 = vld [vmem:[%s363] sm:$0xff]
        %v422 = vld [vmem:[%s363 + $0x8] sm:$0xff]
        %v423 = vld [vmem:[%s363 + $0x10] sm:$0xff]
        %v424 = vld [vmem:[%s363 + $0x18] sm:$0xff]
        %v425 = vld [vmem:[%s363 + $0x20] sm:$0xff]
        %v426 = vld [vmem:[%s363 + $0x28] sm:$0xff]
        %v427 = vld [vmem:[%s363 + $0x30] sm:$0xff]
        %v428 = vld [vmem:[%s363 + $0x38] sm:$0xff]
        %v429 = vld [vmem:[%s363 + $0x40] sm:$0xff]
        %v430 = vld [vmem:[%s363 + $0x48] sm:$0xff]
        %v431 = vld [vmem:[%s363 + $0x50] sm:$0xff]
        %v432 = vld [vmem:[%s363 + $0x58] sm:$0xff]
        %v433 = vld [vmem:[%s363 + $0x60] sm:$0xff]
        %v434 = vld [vmem:[%s363 + $0x68] sm:$0xff]
        %v435 = vld [vmem:[%s363 + $0x70] sm:$0xff]
        %v436 = vld [vmem:[%s363 + $0x78] sm:$0xff]
        %v437 = vld [vmem:[%s363 + $0x80] sm:$0xff]
        %v438 = vld [vmem:[%s363 + $0x88] sm:$0xff]
        %v439 = vld [vmem:[%s363 + $0x90] sm:$0xff]
        %v440 = vld [vmem:[%s363 + $0x98] sm:$0xff]
        %v441 = vld [vmem:[%s363 + $0xa0] sm:$0xff]
        %v442 = vld [vmem:[%s363 + $0xa8] sm:$0xff]
        %v443 = vld [vmem:[%s363 + $0xb0] sm:$0xff]
        %v444 = vld [vmem:[%s363 + $0xb8] sm:$0xff]
        %v445 = vld [vmem:[%s363 + $0xc0] sm:$0xff]
        %v446 = vld [vmem:[%s363 + $0xc8] sm:$0xff]
        %v447 = vld [vmem:[%s363 + $0xd0] sm:$0xff]
        %v448 = vld [vmem:[%s363 + $0xd8] sm:$0xff]
        %v449 = vld [vmem:[%s363 + $0xe0] sm:$0xff]
        %v450 = vld [vmem:[%s363 + $0xe8] sm:$0xff]
        %v451 = vld [vmem:[%s363 + $0xf0] sm:$0xff]
        %v452 = vld [vmem:[%s363 + $0xf8] sm:$0xff]
        %v453 = vld [vmem:[#allocation5] sm:$0xff]
        %v454 = vld [vmem:[#allocation5 + $0x8] sm:$0xff]
        %v455 = vld [vmem:[#allocation5 + $0x10] sm:$0xff]
        %v456 = vld [vmem:[#allocation5 + $0x18] sm:$0xff]
        %v457 = vld [vmem:[#allocation5 + $0x20] sm:$0xff]
        %v458 = vld [vmem:[#allocation5 + $0x28] sm:$0xff]
        %v459 = vld [vmem:[#allocation5 + $0x30] sm:$0xff]
        %v460 = vld [vmem:[#allocation5 + $0x38] sm:$0xff]
        %v461 = vld [vmem:[#allocation5 + $0x40] sm:$0xff]
        %v462 = vld [vmem:[#allocation5 + $0x48] sm:$0xff]
        %v463 = vld [vmem:[#allocation5 + $0x50] sm:$0xff]
        %v464 = vld [vmem:[#allocation5 + $0x58] sm:$0xff]
        %v465 = vld [vmem:[#allocation5 + $0x60] sm:$0xff]
        %v466 = vld [vmem:[#allocation5 + $0x68] sm:$0xff]
        %v467 = vld [vmem:[#allocation5 + $0x70] sm:$0xff]
        %v468 = vld [vmem:[#allocation5 + $0x78] sm:$0xff]
        %v469 = vld [vmem:[%s2] sm:$0x1]
        %v471 = vperm.slane %v469, 0
        %473 = vmatpush.msra.mxu0 %v468
        %474 = vmatpush.msra.mxu0 %v467
        %475 = vmatpush.msra.mxu0 %v466
        %476 = vmatpush.msra.mxu0 %v465
        %477 = vmatpush.msra.mxu0 %v464
        %478 = vmatpush.msra.mxu0 %v463
        %479 = vmatpush.msra.mxu0 %v462
        %480 = vmatpush.msra.mxu0 %v461
        %481 = vmatpush.msra.mxu0 %v460
        %482 = vmatpush.msra.mxu0 %v459
        %483 = vmatpush.msra.mxu0 %v458
        %484 = vmatpush.msra.mxu0 %v457
        %485 = vmatpush.msra.mxu0 %v456
        %486 = vmatpush.msra.mxu0 %v455
        %487 = vmatpush.msra.mxu0 %v454
        %488 = vmatpush.msra.mxu0 %v453
        %489 = vmatmul.f32.gmra.mxu0 %v421
        %v490 = vpop.f32.mrf.mxu0
        %v491 = vadd.f32 %v471, %v490
        %492 = vmatmul.f32.gmra.mxu0 %v422
        %v493 = vpop.f32.mrf.mxu0
        %v494 = vadd.f32 %v471, %v493
        %495 = vmatmul.f32.gmra.mxu0 %v423
        %v496 = vpop.f32.mrf.mxu0
        %v497 = vadd.f32 %v471, %v496
        %498 = vmatmul.f32.gmra.mxu0 %v424
        %v499 = vpop.f32.mrf.mxu0
        %v500 = vadd.f32 %v471, %v499
        %501 = vmatmul.f32.gmra.mxu0 %v425
        %v502 = vpop.f32.mrf.mxu0
        %v503 = vadd.f32 %v471, %v502
        %504 = vmatmul.f32.gmra.mxu0 %v426
        %v505 = vpop.f32.mrf.mxu0
        %v506 = vadd.f32 %v471, %v505
        %507 = vmatmul.f32.gmra.mxu0 %v427
        %v508 = vpop.f32.mrf.mxu0
        %v509 = vadd.f32 %v471, %v508
        %510 = vmatmul.f32.gmra.mxu0 %v428
        %v511 = vpop.f32.mrf.mxu0
        %v512 = vadd.f32 %v471, %v511
        %513 = vmatmul.f32.gmra.mxu0 %v429
        %v514 = vpop.f32.mrf.mxu0
        %v515 = vadd.f32 %v471, %v514
        %516 = vmatmul.f32.gmra.mxu0 %v430
        %v517 = vpop.f32.mrf.mxu0
        %v518 = vadd.f32 %v471, %v517
        %519 = vmatmul.f32.gmra.mxu0 %v431
        %v520 = vpop.f32.mrf.mxu0
        %v521 = vadd.f32 %v471, %v520
        %522 = vmatmul.f32.gmra.mxu0 %v432
        %v523 = vpop.f32.mrf.mxu0
        %v524 = vadd.f32 %v471, %v523
        %525 = vmatmul.f32.gmra.mxu0 %v433
        %v526 = vpop.f32.mrf.mxu0
        %v527 = vadd.f32 %v471, %v526
        %528 = vmatmul.f32.gmra.mxu0 %v434
        %v529 = vpop.f32.mrf.mxu0
        %v530 = vadd.f32 %v471, %v529
        %531 = vmatmul.f32.gmra.mxu0 %v435
        %v532 = vpop.f32.mrf.mxu0
        %v533 = vadd.f32 %v471, %v532
        %534 = vmatmul.f32.gmra.mxu0 %v436
        %v535 = vpop.f32.mrf.mxu0
        %v536 = vadd.f32 %v471, %v535
        %537 = vmatmul.f32.gmra.mxu0 %v437
        %v538 = vpop.f32.mrf.mxu0
        %v539 = vadd.f32 %v471, %v538
        %540 = vmatmul.f32.gmra.mxu0 %v438
        %v541 = vpop.f32.mrf.mxu0
        %v542 = vadd.f32 %v471, %v541
        %543 = vmatmul.f32.gmra.mxu0 %v439
        %v544 = vpop.f32.mrf.mxu0
        %v545 = vadd.f32 %v471, %v544
        %546 = vmatmul.f32.gmra.mxu0 %v440
        %v547 = vpop.f32.mrf.mxu0
        %v548 = vadd.f32 %v471, %v547
        %549 = vmatmul.f32.gmra.mxu0 %v441
        %v550 = vpop.f32.mrf.mxu0
        %v551 = vadd.f32 %v471, %v550
        %552 = vmatmul.f32.gmra.mxu0 %v442
        %v553 = vpop.f32.mrf.mxu0
        %v554 = vadd.f32 %v471, %v553
        %555 = vmatmul.f32.gmra.mxu0 %v443
        %v556 = vpop.f32.mrf.mxu0
        %v557 = vadd.f32 %v471, %v556
        %558 = vmatmul.f32.gmra.mxu0 %v444
        %v559 = vpop.f32.mrf.mxu0
        %v560 = vadd.f32 %v471, %v559
        %561 = vmatmul.f32.gmra.mxu0 %v445
        %v562 = vpop.f32.mrf.mxu0
        %v563 = vadd.f32 %v471, %v562
        %564 = vmatmul.f32.gmra.mxu0 %v446
        %v565 = vpop.f32.mrf.mxu0
        %v566 = vadd.f32 %v471, %v565
        %567 = vmatmul.f32.gmra.mxu0 %v447
        %v568 = vpop.f32.mrf.mxu0
        %v569 = vadd.f32 %v471, %v568
        %570 = vmatmul.f32.gmra.mxu0 %v448
        %v571 = vpop.f32.mrf.mxu0
        %v572 = vadd.f32 %v471, %v571
        %573 = vmatmul.f32.gmra.mxu0 %v449
        %v574 = vpop.f32.mrf.mxu0
        %v575 = vadd.f32 %v471, %v574
        %576 = vmatmul.f32.gmra.mxu0 %v450
        %v577 = vpop.f32.mrf.mxu0
        %v578 = vadd.f32 %v471, %v577
        %579 = vmatmul.f32.gmra.mxu0 %v451
        %v580 = vpop.f32.mrf.mxu0
        %v581 = vadd.f32 %v471, %v580
        %582 = vmatmul.f32.gmra.mxu0 %v452
        %v583 = vpop.f32.mrf.mxu0
        %v584 = vadd.f32 %v471, %v583
        %585 = vdwg.mxu0
        %v586 = vmax.f32 %v491, 0.0
        %v587 = vmax.f32 %v494, 0.0
        %v588 = vmax.f32 %v497, 0.0
        %v589 = vmax.f32 %v500, 0.0
        %v590 = vmax.f32 %v503, 0.0
        %v591 = vmax.f32 %v506, 0.0
        %v592 = vmax.f32 %v509, 0.0
        %v593 = vmax.f32 %v512, 0.0
        %v594 = vmax.f32 %v515, 0.0
        %v595 = vmax.f32 %v518, 0.0
        %v596 = vmax.f32 %v521, 0.0
        %v597 = vmax.f32 %v524, 0.0
        %v598 = vmax.f32 %v527, 0.0
        %v599 = vmax.f32 %v530, 0.0
        %v600 = vmax.f32 %v533, 0.0
        %v601 = vmax.f32 %v536, 0.0
        %v602 = vmax.f32 %v539, 0.0
        %v603 = vmax.f32 %v542, 0.0
        %v604 = vmax.f32 %v545, 0.0
        %v605 = vmax.f32 %v548, 0.0
        %v606 = vmax.f32 %v551, 0.0
        %v607 = vmax.f32 %v554, 0.0
        %v608 = vmax.f32 %v557, 0.0
        %v609 = vmax.f32 %v560, 0.0
        %v610 = vmax.f32 %v563, 0.0
        %v611 = vmax.f32 %v566, 0.0
        %v612 = vmax.f32 %v569, 0.0
        %v613 = vmax.f32 %v572, 0.0
        %v614 = vmax.f32 %v575, 0.0
        %v615 = vmax.f32 %v578, 0.0
        %v616 = vmax.f32 %v581, 0.0
        %v617 = vmax.f32 %v584, 0.0
        %v618 = vld [vmem:[#allocation7] sm:$0xff]
        %v619 = vld [vmem:[#allocation7 + $0x8] sm:$0xff]
        %v620 = vld [vmem:[#allocation7 + $0x10] sm:$0xff]
        %v621 = vld [vmem:[#allocation7 + $0x18] sm:$0xff]
        %v622 = vld [vmem:[#allocation7 + $0x20] sm:$0xff]
        %v623 = vld [vmem:[#allocation7 + $0x28] sm:$0xff]
        %v624 = vld [vmem:[#allocation7 + $0x30] sm:$0xff]
        %v625 = vld [vmem:[#allocation7 + $0x38] sm:$0xff]
        %v626 = vld [vmem:[#allocation7 + $0x40] sm:$0xff]
        %v627 = vld [vmem:[#allocation7 + $0x48] sm:$0xff]
        %v628 = vld [vmem:[#allocation7 + $0x50] sm:$0xff]
        %v629 = vld [vmem:[#allocation7 + $0x58] sm:$0xff]
        %v630 = vld [vmem:[#allocation7 + $0x60] sm:$0xff]
        %v631 = vld [vmem:[#allocation7 + $0x68] sm:$0xff]
        %v632 = vld [vmem:[#allocation7 + $0x70] sm:$0xff]
        %v633 = vld [vmem:[#allocation7 + $0x78] sm:$0xff]
        %v634 = vld [vmem:[%s4] sm:$0x1]
        %v636 = vperm.slane %v634, 0
        %638 = vmatpush.msra.mxu0 %v633
        %639 = vmatpush.msra.mxu0 %v632
        %640 = vmatpush.msra.mxu0 %v631
        %641 = vmatpush.msra.mxu0 %v630
        %642 = vmatpush.msra.mxu0 %v629
        %643 = vmatpush.msra.mxu0 %v628
        %644 = vmatpush.msra.mxu0 %v627
        %645 = vmatpush.msra.mxu0 %v626
        %646 = vmatpush.msra.mxu0 %v625
        %647 = vmatpush.msra.mxu0 %v624
        %648 = vmatpush.msra.mxu0 %v623
        %649 = vmatpush.msra.mxu0 %v622
        %650 = vmatpush.msra.mxu0 %v621
        %651 = vmatpush.msra.mxu0 %v620
        %652 = vmatpush.msra.mxu0 %v619
        %653 = vmatpush.msra.mxu0 %v618
        %654 = vmatmul.f32.gmra.mxu0 %v586
        %v655 = vpop.f32.mrf.mxu0
        %v656 = vadd.f32 %v636, %v655
        %657 = vmatmul.f32.gmra.mxu0 %v587
        %v658 = vpop.f32.mrf.mxu0
        %v659 = vadd.f32 %v636, %v658
        %660 = vmatmul.f32.gmra.mxu0 %v588
        %v661 = vpop.f32.mrf.mxu0
        %v662 = vadd.f32 %v636, %v661
        %663 = vmatmul.f32.gmra.mxu0 %v589
        %v664 = vpop.f32.mrf.mxu0
        %v665 = vadd.f32 %v636, %v664
        %666 = vmatmul.f32.gmra.mxu0 %v590
        %v667 = vpop.f32.mrf.mxu0
        %v668 = vadd.f32 %v636, %v667
        %669 = vmatmul.f32.gmra.mxu0 %v591
        %v670 = vpop.f32.mrf.mxu0
        %v671 = vadd.f32 %v636, %v670
        %672 = vmatmul.f32.gmra.mxu0 %v592
        %v673 = vpop.f32.mrf.mxu0
        %v674 = vadd.f32 %v636, %v673
        %675 = vmatmul.f32.gmra.mxu0 %v593
        %v676 = vpop.f32.mrf.mxu0
        %v677 = vadd.f32 %v636, %v676
        %678 = vmatmul.f32.gmra.mxu0 %v594
        %v679 = vpop.f32.mrf.mxu0
        %v680 = vadd.f32 %v636, %v679
        %681 = vmatmul.f32.gmra.mxu0 %v595
        %v682 = vpop.f32.mrf.mxu0
        %v683 = vadd.f32 %v636, %v682
        %684 = vmatmul.f32.gmra.mxu0 %v596
        %v685 = vpop.f32.mrf.mxu0
        %v686 = vadd.f32 %v636, %v685
        %687 = vmatmul.f32.gmra.mxu0 %v597
        %v688 = vpop.f32.mrf.mxu0
        %v689 = vadd.f32 %v636, %v688
        %690 = vmatmul.f32.gmra.mxu0 %v598
        %v691 = vpop.f32.mrf.mxu0
        %v692 = vadd.f32 %v636, %v691
        %693 = vmatmul.f32.gmra.mxu0 %v599
        %v694 = vpop.f32.mrf.mxu0
        %v695 = vadd.f32 %v636, %v694
        %696 = vmatmul.f32.gmra.mxu0 %v600
        %v697 = vpop.f32.mrf.mxu0
        %v698 = vadd.f32 %v636, %v697
        %699 = vmatmul.f32.gmra.mxu0 %v601
        %v700 = vpop.f32.mrf.mxu0
        %v701 = vadd.f32 %v636, %v700
        %702 = vmatmul.f32.gmra.mxu0 %v602
        %v703 = vpop.f32.mrf.mxu0
        %v704 = vadd.f32 %v636, %v703
        %705 = vmatmul.f32.gmra.mxu0 %v603
        %v706 = vpop.f32.mrf.mxu0
        %v707 = vadd.f32 %v636, %v706
        %708 = vmatmul.f32.gmra.mxu0 %v604
        %v709 = vpop.f32.mrf.mxu0
        %v710 = vadd.f32 %v636, %v709
        %711 = vmatmul.f32.gmra.mxu0 %v605
        %v712 = vpop.f32.mrf.mxu0
        %v713 = vadd.f32 %v636, %v712
        %714 = vmatmul.f32.gmra.mxu0 %v606
        %v715 = vpop.f32.mrf.mxu0
        %v716 = vadd.f32 %v636, %v715
        %717 = vmatmul.f32.gmra.mxu0 %v607
        %v718 = vpop.f32.mrf.mxu0
        %v719 = vadd.f32 %v636, %v718
        %720 = vmatmul.f32.gmra.mxu0 %v608
        %v721 = vpop.f32.mrf.mxu0
        %v722 = vadd.f32 %v636, %v721
        %723 = vmatmul.f32.gmra.mxu0 %v609
        %v724 = vpop.f32.mrf.mxu0
        %v725 = vadd.f32 %v636, %v724
        %726 = vmatmul.f32.gmra.mxu0 %v610
        %v727 = vpop.f32.mrf.mxu0
        %v728 = vadd.f32 %v636, %v727
        %729 = vmatmul.f32.gmra.mxu0 %v611
        %v730 = vpop.f32.mrf.mxu0
        %v731 = vadd.f32 %v636, %v730
        %732 = vmatmul.f32.gmra.mxu0 %v612
        %v733 = vpop.f32.mrf.mxu0
        %v734 = vadd.f32 %v636, %v733
        %735 = vmatmul.f32.gmra.mxu0 %v613
        %v736 = vpop.f32.mrf.mxu0
        %v737 = vadd.f32 %v636, %v736
        %738 = vmatmul.f32.gmra.mxu0 %v614
        %v739 = vpop.f32.mrf.mxu0
        %v740 = vadd.f32 %v636, %v739
        %741 = vmatmul.f32.gmra.mxu0 %v615
        %v742 = vpop.f32.mrf.mxu0
        %v743 = vadd.f32 %v636, %v742
        %744 = vmatmul.f32.gmra.mxu0 %v616
        %v745 = vpop.f32.mrf.mxu0
        %v746 = vadd.f32 %v636, %v745
        %747 = vmatmul.f32.gmra.mxu0 %v617
        %v748 = vpop.f32.mrf.mxu0
        %v749 = vadd.f32 %v636, %v748
        %750 = vdwg.mxu0
        %v751 = vmax.f32 %v656, 0.0
        %v752 = vmax.f32 %v659, 0.0
        %v753 = vmax.f32 %v662, 0.0
        %v754 = vmax.f32 %v665, 0.0
        %v755 = vmax.f32 %v668, 0.0
        %v756 = vmax.f32 %v671, 0.0
        %v757 = vmax.f32 %v674, 0.0
        %v758 = vmax.f32 %v677, 0.0
        %v759 = vmax.f32 %v680, 0.0
        %v760 = vmax.f32 %v683, 0.0
        %v761 = vmax.f32 %v686, 0.0
        %v762 = vmax.f32 %v689, 0.0
        %v763 = vmax.f32 %v692, 0.0
        %v764 = vmax.f32 %v695, 0.0
        %v765 = vmax.f32 %v698, 0.0
        %v766 = vmax.f32 %v701, 0.0
        %v767 = vmax.f32 %v704, 0.0
        %v768 = vmax.f32 %v707, 0.0
        %v769 = vmax.f32 %v710, 0.0
        %v770 = vmax.f32 %v713, 0.0
        %v771 = vmax.f32 %v716, 0.0
        %v772 = vmax.f32 %v719, 0.0
        %v773 = vmax.f32 %v722, 0.0
        %v774 = vmax.f32 %v725, 0.0
        %v775 = vmax.f32 %v728, 0.0
        %v776 = vmax.f32 %v731, 0.0
        %v777 = vmax.f32 %v734, 0.0
        %v778 = vmax.f32 %v737, 0.0
        %v779 = vmax.f32 %v740, 0.0
        %v780 = vmax.f32 %v743, 0.0
        %v781 = vmax.f32 %v746, 0.0
        %v782 = vmax.f32 %v749, 0.0
        %v783 = vld [vmem:[#allocation8] sm:$0xff]
        %v784 = vld [vmem:[#allocation8 + $0x8] sm:$0xff]
        %v785 = vld [vmem:[#allocation8 + $0x10] sm:$0xff]
        %v786 = vld [vmem:[#allocation8 + $0x18] sm:$0xff]
        %v787 = vld [vmem:[#allocation8 + $0x20] sm:$0xff]
        %v788 = vld [vmem:[#allocation8 + $0x28] sm:$0xff]
        %v789 = vld [vmem:[#allocation8 + $0x30] sm:$0xff]
        %v790 = vld [vmem:[#allocation8 + $0x38] sm:$0xff]
        %v791 = vld [vmem:[#allocation8 + $0x40] sm:$0xff]
        %v792 = vld [vmem:[#allocation8 + $0x48] sm:$0xff]
        %v793 = vld [vmem:[#allocation8 + $0x50] sm:$0xff]
        %v794 = vld [vmem:[#allocation8 + $0x58] sm:$0xff]
        %v795 = vld [vmem:[#allocation8 + $0x60] sm:$0xff]
        %v796 = vld [vmem:[#allocation8 + $0x68] sm:$0xff]
        %v797 = vld [vmem:[#allocation8 + $0x70] sm:$0xff]
        %v798 = vld [vmem:[#allocation8 + $0x78] sm:$0xff]
        %v799 = vld [vmem:[%s6] sm:$0x1]
        %v801 = vperm.slane %v799, 0
        %803 = vmatpush.msra.mxu0 %v798
        %804 = vmatpush.msra.mxu0 %v797
        %805 = vmatpush.msra.mxu0 %v796
        %806 = vmatpush.msra.mxu0 %v795
        %807 = vmatpush.msra.mxu0 %v794
        %808 = vmatpush.msra.mxu0 %v793
        %809 = vmatpush.msra.mxu0 %v792
        %810 = vmatpush.msra.mxu0 %v791
        %811 = vmatpush.msra.mxu0 %v790
        %812 = vmatpush.msra.mxu0 %v789
        %813 = vmatpush.msra.mxu0 %v788
        %814 = vmatpush.msra.mxu0 %v787
        %815 = vmatpush.msra.mxu0 %v786
        %816 = vmatpush.msra.mxu0 %v785
        %817 = vmatpush.msra.mxu0 %v784
        %818 = vmatpush.msra.mxu0 %v783
        %819 = vmatmul.f32.gmra.mxu0 %v751
        %v820 = vpop.f32.mrf.mxu0
        %v821 = vadd.f32 %v801, %v820
        %822 = vmatmul.f32.gmra.mxu0 %v752
        %v823 = vpop.f32.mrf.mxu0
        %v824 = vadd.f32 %v801, %v823
        %825 = vmatmul.f32.gmra.mxu0 %v753
        %v826 = vpop.f32.mrf.mxu0
        %v827 = vadd.f32 %v801, %v826
        %828 = vmatmul.f32.gmra.mxu0 %v754
        %v829 = vpop.f32.mrf.mxu0
        %v830 = vadd.f32 %v801, %v829
        %831 = vmatmul.f32.gmra.mxu0 %v755
        %v832 = vpop.f32.mrf.mxu0
        %v833 = vadd.f32 %v801, %v832
        %834 = vmatmul.f32.gmra.mxu0 %v756
        %v835 = vpop.f32.mrf.mxu0
        %v836 = vadd.f32 %v801, %v835
        %837 = vmatmul.f32.gmra.mxu0 %v757
        %v838 = vpop.f32.mrf.mxu0
        %v839 = vadd.f32 %v801, %v838
        %840 = vmatmul.f32.gmra.mxu0 %v758
        %v841 = vpop.f32.mrf.mxu0
        %v842 = vadd.f32 %v801, %v841
        %843 = vmatmul.f32.gmra.mxu0 %v759
        %v844 = vpop.f32.mrf.mxu0
        %v845 = vadd.f32 %v801, %v844
        %846 = vmatmul.f32.gmra.mxu0 %v760
        %v847 = vpop.f32.mrf.mxu0
        %v848 = vadd.f32 %v801, %v847
        %849 = vmatmul.f32.gmra.mxu0 %v761
        %v850 = vpop.f32.mrf.mxu0
        %v851 = vadd.f32 %v801, %v850
        %852 = vmatmul.f32.gmra.mxu0 %v762
        %v853 = vpop.f32.mrf.mxu0
        %v854 = vadd.f32 %v801, %v853
        %855 = vmatmul.f32.gmra.mxu0 %v763
        %v856 = vpop.f32.mrf.mxu0
        %v857 = vadd.f32 %v801, %v856
        %858 = vmatmul.f32.gmra.mxu0 %v764
        %v859 = vpop.f32.mrf.mxu0
        %v860 = vadd.f32 %v801, %v859
        %861 = vmatmul.f32.gmra.mxu0 %v765
        %v862 = vpop.f32.mrf.mxu0
        %v863 = vadd.f32 %v801, %v862
        %864 = vmatmul.f32.gmra.mxu0 %v766
        %v865 = vpop.f32.mrf.mxu0
        %v866 = vadd.f32 %v801, %v865
        %867 = vmatmul.f32.gmra.mxu0 %v767
        %v868 = vpop.f32.mrf.mxu0
        %v869 = vadd.f32 %v801, %v868
        %870 = vmatmul.f32.gmra.mxu0 %v768
        %v871 = vpop.f32.mrf.mxu0
        %v872 = vadd.f32 %v801, %v871
        %873 = vmatmul.f32.gmra.mxu0 %v769
        %v874 = vpop.f32.mrf.mxu0
        %v875 = vadd.f32 %v801, %v874
        %876 = vmatmul.f32.gmra.mxu0 %v770
        %v877 = vpop.f32.mrf.mxu0
        %v878 = vadd.f32 %v801, %v877
        %879 = vmatmul.f32.gmra.mxu0 %v771
        %v880 = vpop.f32.mrf.mxu0
        %v881 = vadd.f32 %v801, %v880
        %882 = vmatmul.f32.gmra.mxu0 %v772
        %v883 = vpop.f32.mrf.mxu0
        %v884 = vadd.f32 %v801, %v883
        %885 = vmatmul.f32.gmra.mxu0 %v773
        %v886 = vpop.f32.mrf.mxu0
        %v887 = vadd.f32 %v801, %v886
        %888 = vmatmul.f32.gmra.mxu0 %v774
        %v889 = vpop.f32.mrf.mxu0
        %v890 = vadd.f32 %v801, %v889
        %891 = vmatmul.f32.gmra.mxu0 %v775
        %v892 = vpop.f32.mrf.mxu0
        %v893 = vadd.f32 %v801, %v892
        %894 = vmatmul.f32.gmra.mxu0 %v776
        %v895 = vpop.f32.mrf.mxu0
        %v896 = vadd.f32 %v801, %v895
        %897 = vmatmul.f32.gmra.mxu0 %v777
        %v898 = vpop.f32.mrf.mxu0
        %v899 = vadd.f32 %v801, %v898
        %900 = vmatmul.f32.gmra.mxu0 %v778
        %v901 = vpop.f32.mrf.mxu0
        %v902 = vadd.f32 %v801, %v901
        %903 = vmatmul.f32.gmra.mxu0 %v779
        %v904 = vpop.f32.mrf.mxu0
        %v905 = vadd.f32 %v801, %v904
        %906 = vmatmul.f32.gmra.mxu0 %v780
        %v907 = vpop.f32.mrf.mxu0
        %v908 = vadd.f32 %v801, %v907
        %909 = vmatmul.f32.gmra.mxu0 %v781
        %v910 = vpop.f32.mrf.mxu0
        %v911 = vadd.f32 %v801, %v910
        %912 = vmatmul.f32.gmra.mxu0 %v782
        %v913 = vpop.f32.mrf.mxu0
        %v914 = vadd.f32 %v801, %v913
        %915 = vdwg.mxu0
        %v916 = vmax.f32 %v821, 0.0
        %v917 = vmax.f32 %v824, 0.0
        %v918 = vmax.f32 %v827, 0.0
        %v919 = vmax.f32 %v830, 0.0
        %v920 = vmax.f32 %v833, 0.0
        %v921 = vmax.f32 %v836, 0.0
        %v922 = vmax.f32 %v839, 0.0
        %v923 = vmax.f32 %v842, 0.0
        %v924 = vmax.f32 %v845, 0.0
        %v925 = vmax.f32 %v848, 0.0
        %v926 = vmax.f32 %v851, 0.0
        %v927 = vmax.f32 %v854, 0.0
        %v928 = vmax.f32 %v857, 0.0
        %v929 = vmax.f32 %v860, 0.0
        %v930 = vmax.f32 %v863, 0.0
        %v931 = vmax.f32 %v866, 0.0
        %v932 = vmax.f32 %v869, 0.0
        %v933 = vmax.f32 %v872, 0.0
        %v934 = vmax.f32 %v875, 0.0
        %v935 = vmax.f32 %v878, 0.0
        %v936 = vmax.f32 %v881, 0.0
        %v937 = vmax.f32 %v884, 0.0
        %v938 = vmax.f32 %v887, 0.0
        %v939 = vmax.f32 %v890, 0.0
        %v940 = vmax.f32 %v893, 0.0
        %v941 = vmax.f32 %v896, 0.0
        %v942 = vmax.f32 %v899, 0.0
        %v943 = vmax.f32 %v902, 0.0
        %v944 = vmax.f32 %v905, 0.0
        %v945 = vmax.f32 %v908, 0.0
        %v946 = vmax.f32 %v911, 0.0
        %v947 = vmax.f32 %v914, 0.0
        %v948 = vld [vmem:[#allocation10] sm:$0xff]
        %v949 = vld [vmem:[#allocation10 + $0x8] sm:$0xff]
        %v950 = vld [vmem:[#allocation10 + $0x10] sm:$0xff]
        %v951 = vld [vmem:[#allocation10 + $0x18] sm:$0xff]
        %v952 = vld [vmem:[#allocation10 + $0x20] sm:$0xff]
        %v953 = vld [vmem:[#allocation10 + $0x28] sm:$0xff]
        %v954 = vld [vmem:[#allocation10 + $0x30] sm:$0xff]
        %v955 = vld [vmem:[#allocation10 + $0x38] sm:$0xff]
        %v956 = vld [vmem:[#allocation10 + $0x40] sm:$0xff]
        %v957 = vld [vmem:[#allocation10 + $0x48] sm:$0xff]
        %v958 = vld [vmem:[#allocation10 + $0x50] sm:$0xff]
        %v959 = vld [vmem:[#allocation10 + $0x58] sm:$0xff]
        %v960 = vld [vmem:[#allocation10 + $0x60] sm:$0xff]
        %v961 = vld [vmem:[#allocation10 + $0x68] sm:$0xff]
        %v962 = vld [vmem:[#allocation10 + $0x70] sm:$0xff]
        %v963 = vld [vmem:[#allocation10 + $0x78] sm:$0xff]
        %v964 = vld [vmem:[%s8] sm:$0x1]
        %v966 = vperm.slane %v964, 0
        %968 = vmatpush.msra.mxu0 %v963
        %969 = vmatpush.msra.mxu0 %v962
        %970 = vmatpush.msra.mxu0 %v961
        %971 = vmatpush.msra.mxu0 %v960
        %972 = vmatpush.msra.mxu0 %v959
        %973 = vmatpush.msra.mxu0 %v958
        %974 = vmatpush.msra.mxu0 %v957
        %975 = vmatpush.msra.mxu0 %v956
        %976 = vmatpush.msra.mxu0 %v955
        %977 = vmatpush.msra.mxu0 %v954
        %978 = vmatpush.msra.mxu0 %v953
        %979 = vmatpush.msra.mxu0 %v952
        %980 = vmatpush.msra.mxu0 %v951
        %981 = vmatpush.msra.mxu0 %v950
        %982 = vmatpush.msra.mxu0 %v949
        %983 = vmatpush.msra.mxu0 %v948
        %984 = vmatmul.f32.gmra.mxu0 %v916
        %v985 = vpop.f32.mrf.mxu0
        %v986 = vadd.f32 %v966, %v985
        %987 = vmatmul.f32.gmra.mxu0 %v917
        %v988 = vpop.f32.mrf.mxu0
        %v989 = vadd.f32 %v966, %v988
        %990 = vmatmul.f32.gmra.mxu0 %v918
        %v991 = vpop.f32.mrf.mxu0
        %v992 = vadd.f32 %v966, %v991
        %993 = vmatmul.f32.gmra.mxu0 %v919
        %v994 = vpop.f32.mrf.mxu0
        %v995 = vadd.f32 %v966, %v994
        %996 = vmatmul.f32.gmra.mxu0 %v920
        %v997 = vpop.f32.mrf.mxu0
        %v998 = vadd.f32 %v966, %v997
        %999 = vmatmul.f32.gmra.mxu0 %v921
        %v1000 = vpop.f32.mrf.mxu0
        %v1001 = vadd.f32 %v966, %v1000
        %1002 = vmatmul.f32.gmra.mxu0 %v922
        %v1003 = vpop.f32.mrf.mxu0
        %v1004 = vadd.f32 %v966, %v1003
        %1005 = vmatmul.f32.gmra.mxu0 %v923
        %v1006 = vpop.f32.mrf.mxu0
        %v1007 = vadd.f32 %v966, %v1006
        %1008 = vmatmul.f32.gmra.mxu0 %v924
        %v1009 = vpop.f32.mrf.mxu0
        %v1010 = vadd.f32 %v966, %v1009
        %1011 = vmatmul.f32.gmra.mxu0 %v925
        %v1012 = vpop.f32.mrf.mxu0
        %v1013 = vadd.f32 %v966, %v1012
        %1014 = vmatmul.f32.gmra.mxu0 %v926
        %v1015 = vpop.f32.mrf.mxu0
        %v1016 = vadd.f32 %v966, %v1015
        %1017 = vmatmul.f32.gmra.mxu0 %v927
        %v1018 = vpop.f32.mrf.mxu0
        %v1019 = vadd.f32 %v966, %v1018
        %1020 = vmatmul.f32.gmra.mxu0 %v928
        %v1021 = vpop.f32.mrf.mxu0
        %v1022 = vadd.f32 %v966, %v1021
        %1023 = vmatmul.f32.gmra.mxu0 %v929
        %v1024 = vpop.f32.mrf.mxu0
        %v1025 = vadd.f32 %v966, %v1024
        %1026 = vmatmul.f32.gmra.mxu0 %v930
        %v1027 = vpop.f32.mrf.mxu0
        %v1028 = vadd.f32 %v966, %v1027
        %1029 = vmatmul.f32.gmra.mxu0 %v931
        %v1030 = vpop.f32.mrf.mxu0
        %v1031 = vadd.f32 %v966, %v1030
        %1032 = vmatmul.f32.gmra.mxu0 %v932
        %v1033 = vpop.f32.mrf.mxu0
        %v1034 = vadd.f32 %v966, %v1033
        %1035 = vmatmul.f32.gmra.mxu0 %v933
        %v1036 = vpop.f32.mrf.mxu0
        %v1037 = vadd.f32 %v966, %v1036
        %1038 = vmatmul.f32.gmra.mxu0 %v934
        %v1039 = vpop.f32.mrf.mxu0
        %v1040 = vadd.f32 %v966, %v1039
        %1041 = vmatmul.f32.gmra.mxu0 %v935
        %v1042 = vpop.f32.mrf.mxu0
        %v1043 = vadd.f32 %v966, %v1042
        %1044 = vmatmul.f32.gmra.mxu0 %v936
        %v1045 = vpop.f32.mrf.mxu0
        %v1046 = vadd.f32 %v966, %v1045
        %1047 = vmatmul.f32.gmra.mxu0 %v937
        %v1048 = vpop.f32.mrf.mxu0
        %v1049 = vadd.f32 %v966, %v1048
        %1050 = vmatmul.f32.gmra.mxu0 %v938
        %v1051 = vpop.f32.mrf.mxu0
        %v1052 = vadd.f32 %v966, %v1051
        %1053 = vmatmul.f32.gmra.mxu0 %v939
        %v1054 = vpop.f32.mrf.mxu0
        %v1055 = vadd.f32 %v966, %v1054
        %1056 = vmatmul.f32.gmra.mxu0 %v940
        %v1057 = vpop.f32.mrf.mxu0
        %v1058 = vadd.f32 %v966, %v1057
        %1059 = vmatmul.f32.gmra.mxu0 %v941
        %v1060 = vpop.f32.mrf.mxu0
        %v1061 = vadd.f32 %v966, %v1060
        %1062 = vmatmul.f32.gmra.mxu0 %v942
        %v1063 = vpop.f32.mrf.mxu0
        %v1064 = vadd.f32 %v966, %v1063
        %1065 = vmatmul.f32.gmra.mxu0 %v943
        %v1066 = vpop.f32.mrf.mxu0
        %v1067 = vadd.f32 %v966, %v1066
        %1068 = vmatmul.f32.gmra.mxu0 %v944
        %v1069 = vpop.f32.mrf.mxu0
        %v1070 = vadd.f32 %v966, %v1069
        %1071 = vmatmul.f32.gmra.mxu0 %v945
        %v1072 = vpop.f32.mrf.mxu0
        %v1073 = vadd.f32 %v966, %v1072
        %1074 = vmatmul.f32.gmra.mxu0 %v946
        %v1075 = vpop.f32.mrf.mxu0
        %v1076 = vadd.f32 %v966, %v1075
        %1077 = vmatmul.f32.gmra.mxu0 %v947
        %v1078 = vpop.f32.mrf.mxu0
        %v1079 = vadd.f32 %v966, %v1078
        %1080 = vdwg.mxu0
        %1081 = vst [vmem:[%s418] sm:$0xff] %v986
        %1082 = vst [vmem:[%s418 + $0x8] sm:$0xff] %v989
        %1083 = vst [vmem:[%s418 + $0x10] sm:$0xff] %v992
        %1084 = vst [vmem:[%s418 + $0x18] sm:$0xff] %v995
        %1085 = vst [vmem:[%s418 + $0x20] sm:$0xff] %v998
        %1086 = vst [vmem:[%s418 + $0x28] sm:$0xff] %v1001
        %1087 = vst [vmem:[%s418 + $0x30] sm:$0xff] %v1004
        %1088 = vst [vmem:[%s418 + $0x38] sm:$0xff] %v1007
        %1089 = vst [vmem:[%s418 + $0x40] sm:$0xff] %v1010
        %1090 = vst [vmem:[%s418 + $0x48] sm:$0xff] %v1013
        %1091 = vst [vmem:[%s418 + $0x50] sm:$0xff] %v1016
        %1092 = vst [vmem:[%s418 + $0x58] sm:$0xff] %v1019
        %1093 = vst [vmem:[%s418 + $0x60] sm:$0xff] %v1022
        %1094 = vst [vmem:[%s418 + $0x68] sm:$0xff] %v1025
        %1095 = vst [vmem:[%s418 + $0x70] sm:$0xff] %v1028
        %1096 = vst [vmem:[%s418 + $0x78] sm:$0xff] %v1031
        %1097 = vst [vmem:[%s418 + $0x80] sm:$0xff] %v1034
        %1098 = vst [vmem:[%s418 + $0x88] sm:$0xff] %v1037
        %1099 = vst [vmem:[%s418 + $0x90] sm:$0xff] %v1040
        %1100 = vst [vmem:[%s418 + $0x98] sm:$0xff] %v1043
        %1101 = vst [vmem:[%s418 + $0xa0] sm:$0xff] %v1046
        %1102 = vst [vmem:[%s418 + $0xa8] sm:$0xff] %v1049
        %1103 = vst [vmem:[%s418 + $0xb0] sm:$0xff] %v1052
        %1104 = vst [vmem:[%s418 + $0xb8] sm:$0xff] %v1055
        %1105 = vst [vmem:[%s418 + $0xc0] sm:$0xff] %v1058
        %1106 = vst [vmem:[%s418 + $0xc8] sm:$0xff] %v1061
        %1107 = vst [vmem:[%s418 + $0xd0] sm:$0xff] %v1064
        %1108 = vst [vmem:[%s418 + $0xd8] sm:$0xff] %v1067
        %1109 = vst [vmem:[%s418 + $0xe0] sm:$0xff] %v1070
        %1110 = vst [vmem:[%s418 + $0xe8] sm:$0xff] %v1073
        %1111 = vst [vmem:[%s418 + $0xf0] sm:$0xff] %v1076
        %1112 = vst [vmem:[%s418 + $0xf8] sm:$0xff] %v1079
        %s1113 = sand.u32 %s230, 1
        %s1114 = scalar_lea.sflag [#allocation4], %s1113
        %s1115 = sand.u32 %s230, 1
        %s1116 = smul.addr %s1115, 256
        %s1117 = scalar_lea.vmem [#allocation11], %s1116
        // Predicated region
        $region77: #{tpu_custom_call.1} parent=55 // pred_check
          %p1118 = pneg %p240
        $region78: #{tpu_custom_call.1} parent=55 // pred_check_branch
          %1120 = sbr.rel (%p1118) target = $region80
        $region79: #{tpu_custom_call.1} parent=55 // pred_region
          %s1121 = smul.u32 32, %s28
          %1123 = vsyncadd %s1114, 0
          %s1124 = smul.addr %s1121, 8
          %s1125 = scalar_lea.hbm %s9, %s1124
          %s1126 = sshll.u32 %s1117, 4
          %s1127 = int_to_ptr.vmem [resolvable:$true] %s1126
          %s1128 = sshll.u32 %s1125, 4
          %s1129 = int_to_ptr.hbm [resolvable:$true] %s1128
          %1134 = dma.vmem_to_hbm [thread:$0]  %s1127, 4096, %s1129, %s1114, 128, 128, 8
        $region80: #{tpu_custom_call.1} parent=55 // pred_fallthru
          _
      $region56: #{tpu_custom_call.1} parent=5 // pred_fallthru
        _
      %p1135 = scmp.le.s32.totalorder 2, %s23
      // Predicated region
      $region81: #{tpu_custom_call.1} parent=5 // pred_check
        %p1136 = pneg %p1135
      $region82: #{tpu_custom_call.1} parent=5 // pred_check_branch
        %1138 = sbr.rel (%p1136) target = $region84
      $region83: #{tpu_custom_call.1} parent=5 // pred_region
        %s1139 = ssub.s32 %s23, 2
        // Predicated region
        $region85: #{tpu_custom_call.1} parent=83 // pred_check
          %p1140 = pneg %p246
        $region86: #{tpu_custom_call.1} parent=83 // pred_check_branch
          %1142 = sbr.rel (%p1140) target = $region88
        $region87: #{tpu_custom_call.1} parent=83 // pred_region
          %s1143 = sand.u32 %s231, 1
          %s1144 = scalar_lea.sflag [#allocation4], %s1143
          %s1145 = sand.u32 %s231, 1
          %s1146 = smul.addr %s1145, 256
          %s1147 = scalar_lea.vmem [#allocation11], %s1146
          %1149 = dma.done %s1144, 4096
        $region88: #{tpu_custom_call.1} parent=83 // pred_fallthru
          _
      $region84: #{tpu_custom_call.1} parent=5 // pred_fallthru
        _
    $region6: #{tpu_custom_call.1} parent=1 // loop_footer
      %s27 = sadd.s32 1, %s23
    $region7: #{tpu_custom_call.1} parent=1 // loop_footer_branch
      %22 = sbr.rel target = $region3
    $region8: #{tpu_custom_call.1} parent=1 // loop_exit
      _
    %1150 = vsyncpa [#allocation3], 1
    %s1151 = scalar_lea.sflag [#allocation3], 1
    %1152 = vsyncpa %s1151, 1
    %1153 = vsyncpa [#allocation6], 1
    %1154 = vsyncpa [#allocation9], 1
    %1155 = vsyncpa [#allocation4], 1
    %s1156 = scalar_lea.sflag [#allocation4], 1
    %1157 = vsyncpa %s1156, 1

</llo_original>
